<compile_context>
chip_gen: v7x
topology: tpu7x:2x2x1
jax: 0.10.0
libtpu: 0.0.40
codegen_flags: <defaults>
</compile_context>

<pallas_src>
import functools

import jax
import jax.numpy as jnp
from jax.experimental import pallas as pl
from jax.experimental.pallas import tpu as pltpu

CONV_CHANNELS = [3, 64, 128, 1024]   # cfg.use_normals = False
FC_CHANNELS = [1024, 512, 256, 9]
BN_EPS = 1e-5
LANE = 128
# Explicit scoped-VMEM request: above v5e's 16 MiB default, comfortably inside
# v7x's 64 MiB physical VMEM.  Actual footprint at TN=512 is ~5 MiB.
VMEM_LIMIT_BYTES = 32 * 1024 * 1024


# -----------------------------------------------------------------------------------
# Kernel 1: conv1/conv2/conv3 (+folded BN, ReLU) over a tile of points, max-pooled
# into a per-batch (1, 1, 1024) feature accumulator held resident in the output block.
# -----------------------------------------------------------------------------------
def _conv_pool_kernel(x_ref, w1_ref, b1_ref, w2_ref, b2_ref, w3_ref, b3_ref,
                      pooled_ref, *, n_points, tile_n):
    t = pl.program_id(1)

    x = x_ref[0]                                                     # (TN, 3) f32
    # conv1: K=3 -> negligible FLOPs, keep f32 for input fidelity.
    h = jnp.dot(x, w1_ref[...], preferred_element_type=jnp.float32) + b1_ref[...]
    h = jnp.maximum(h, 0.0)
    # conv2 / conv3: bf16 operands (MXU native full-rate), f32 accumulation.
    h = jnp.dot(h.astype(jnp.bfloat16), w2_ref[...],
                preferred_element_type=jnp.float32) + b2_ref[...]
    h = jnp.maximum(h, 0.0)
    h = jnp.dot(h.astype(jnp.bfloat16), w3_ref[...],
                preferred_element_type=jnp.float32) + b3_ref[...]
    h = jnp.maximum(h, 0.0)                                          # (TN, 1024) f32, >= 0

    if n_points % tile_n != 0:
        # Tail tile: mask padded rows with 0, which is neutral for the max because
        # every real activation is post-ReLU (>= 0) and the accumulator is 0-init.
        # Padded input rows only pollute their own (masked) output rows, so no NaN
        # can leak into valid rows.
        row = jax.lax.broadcasted_iota(jnp.int32, (tile_n, 1), 0) + t * tile_n
        h = jnp.where(row < n_points, h, 0.0)

    tile_max = jnp.max(h, axis=0, keepdims=True)                     # (1, 1024)

    @pl.when(t == 0)
    def _init():
        pooled_ref[...] = jnp.zeros_like(pooled_ref)

    pooled_ref[0] = jnp.maximum(pooled_ref[0], tile_max)


# -----------------------------------------------------------------------------------
# Kernel 2: FC head batched over all B pooled vectors (M = B, not M = 1 matvecs).
# fc3 weight/bias pre-padded to 128 output lanes (eye(3) folded into the bias) so the
# final store is a single lane-dense (TB, 128) write.
# -----------------------------------------------------------------------------------
def _fc_head_kernel(g_ref, fw1_ref, fb1_ref, fw2_ref, fb2_ref, fw3_ref, fb3_ref,
                    out_ref):
    f = jnp.dot(g_ref[...].astype(jnp.bfloat16), fw1_ref[...],
                preferred_element_type=jnp.float32) + fb1_ref[...]
    f = jnp.maximum(f, 0.0)
    f = jnp.dot(f.astype(jnp.bfloat16), fw2_ref[...],
                preferred_element_type=jnp.float32) + fb2_ref[...]
    f = jnp.maximum(f, 0.0)
    f = jnp.dot(f.astype(jnp.bfloat16), fw3_ref[...],
                preferred_element_type=jnp.float32) + fb3_ref[...]
    out_ref[...] = f                                                 # (TB, 128)


def stn3d_forward(x_bcn, params, *, tile_n=512, tile_b=256):
    """x_bcn: (B, 3, N) float32 (PyTorch NCW layout). Returns (B, 3, 3) float32."""
    (w1, b1, w2, b2, w3, b3, fw1, fb1, fw2, fb2, fw3, fb3) = params

    # TODO(synk): the NWC transpose below is one extra (small) HBM pass over the
    # input; reading the NCW array directly would require an in-kernel (3, TN)
    # transpose for layer 1 — kept out to preserve the proven lane layout.
    x = jnp.transpose(x_bcn, (0, 2, 1)).astype(jnp.float32)          # (B, N, 3)
    B, N, Cin = x.shape

    tn = N if N <= tile_n else tile_n          # TN == N, or a multiple of 8 (512)
    n_tiles = pl.cdiv(N, tn)

    # Parameter glue (cheap, weight-sized XLA ops): bf16 weights for all K>=64
    # matmuls, f32 biases; fc3 padded to 128 lanes with bias+eye(3) fused.
    w2b, w3b = w2.astype(jnp.bfloat16), w3.astype(jnp.bfloat16)
    fw1b, fw2b = fw1.astype(jnp.bfloat16), fw2.astype(jnp.bfloat16)
    fw3p = jnp.zeros((FC_CHANNELS[2], LANE), jnp.float32).at[:, :9].set(fw3)
    fw3p = fw3p.astype(jnp.bfloat16)
    eye9 = jnp.eye(3, dtype=jnp.float32).reshape(1, 9)
    fb3e = jnp.zeros((1, LANE), jnp.float32).at[:, :9].set(fb3 + eye9)

    def const_spec(arr, n_grid_axes):
        if n_grid_axes == 2:
            return pl.BlockSpec(arr.shape, lambda b, t: (0, 0))
        return pl.BlockSpec(arr.shape, lambda i: (0, 0))

    # ---- kernel 1: conv stack + max pool over points --------------------------------
    conv_kernel = functools.partial(_conv_pool_kernel, n_points=N, tile_n=tn)
    pooled = pl.pallas_call(
        conv_kernel,
        out_shape=jax.ShapeDtypeStruct((B, 1, 1024), jnp.float32),
        grid=(B, n_tiles),
        in_specs=[pl.BlockSpec((1, tn, Cin), lambda b, t: (b, t, 0)),
                  const_spec(w1, 2), const_spec(b1, 2),
                  const_spec(w2b, 2), const_spec(b2, 2),
                  const_spec(w3b, 2), const_spec(b3, 2)],
        out_specs=pl.BlockSpec((1, 1, 1024), lambda b, t: (b, 0, 0)),
        compiler_params=pltpu.CompilerParams(
            dimension_semantics=("parallel", "arbitrary"),
            vmem_limit_bytes=VMEM_LIMIT_BYTES),
    )(x, w1, b1, w2b, b2, w3b, b3)

    pooled = pooled.reshape(B, 1024)

    # ---- kernel 2: batched FC head ---------------------------------------------------
    tb = B if B <= tile_b else tile_b
    b_tiles = pl.cdiv(B, tb)
    out_pad = pl.pallas_call(
        _fc_head_kernel,
        out_shape=jax.ShapeDtypeStruct((B, LANE), jnp.float32),
        grid=(b_tiles,),
        in_specs=[pl.BlockSpec((tb, 1024), lambda i: (i, 0)),
                  const_spec(fw1b, 1), const_spec(fb1, 1),
                  const_spec(fw2b, 1), const_spec(fb2, 1),
                  const_spec(fw3p, 1), const_spec(fb3e, 1)],
        out_specs=pl.BlockSpec((tb, LANE), lambda i: (i, 0)),
        compiler_params=pltpu.CompilerParams(
            dimension_semantics=("parallel",),
            vmem_limit_bytes=VMEM_LIMIT_BYTES),
    )(pooled, fw1b, fb1, fw2b, fb2, fw3p, fb3e)

    return out_pad[:, :9].reshape(B, 3, 3)


# -----------------------------------------------------------------------------------
# Parameters (synthetic, deterministic) with eval-mode BatchNorm folded in.
# -----------------------------------------------------------------------------------
def _fold_bn(w, b, gamma, beta, mean, var, eps=BN_EPS):
    # w: (in, out), b: (out,). Eval-mode BN folded into the affine layer.
    scale = gamma / jnp.sqrt(var + eps)
    w_f = w * scale[None, :]
    b_f = (b - mean) * scale + beta
    return w_f, b_f.reshape(1, -1)


def init_params(key):
    """Deterministic synthetic parameters. Weights stored as (in, out) so x @ W."""
    dims = list(zip(CONV_CHANNELS[:-1], CONV_CHANNELS[1:])) + \
           list(zip(FC_CHANNELS[:-1], FC_CHANNELS[1:]))
    last_idx = len(dims) - 1        # final Linear(256, 9) has no BN / ReLU
    params = []
    for i, (cin, cout) in enumerate(dims):
        key, kw, kb, kg, kbt, km, kv = jax.random.split(key, 7)
        w = jax.random.normal(kw, (cin, cout), jnp.float32) * (1.0 / jnp.sqrt(cin))
        b = jax.random.normal(kb, (cout,), jnp.float32) * 0.01
        if i != last_idx:
            gamma = 1.0 + 0.1 * jax.random.normal(kg, (cout,), jnp.float32)
            beta = 0.1 * jax.random.normal(kbt, (cout,), jnp.float32)
            mean = 0.1 * jax.random.normal(km, (cout,), jnp.float32)
            var = jax.random.uniform(kv, (cout,), jnp.float32, minval=0.5, maxval=1.5)
            w, b2 = _fold_bn(w, b, gamma, beta, mean, var)
            params += [w, b2]
        else:
            params += [w, b.reshape(1, -1)]
    return params


def _reference_forward(x_bcn, params):
    """Pure-JAX f32 reference of the same (BN-folded) forward pass."""
    (w1, b1, w2, b2, w3, b3, fw1, fb1, fw2, fb2, fw3, fb3) = params
    x = jnp.transpose(x_bcn, (0, 2, 1)).astype(jnp.float32)          # (B, N, 3)
    h = jnp.maximum(x @ w1 + b1, 0.0)
    h = jnp.maximum(h @ w2 + b2, 0.0)
    h = jnp.maximum(h @ w3 + b3, 0.0)                                # (B, N, 1024)
    g = jnp.max(h, axis=1)                                           # (B, 1024)
    f = jnp.maximum(g @ fw1 + fb1, 0.0)
    f = jnp.maximum(f @ fw2 + fb2, 0.0)
    f = f @ fw3 + fb3 + jnp.eye(3, dtype=jnp.float32).reshape(1, 9)
    return f.reshape(-1, 3, 3)


if __name__ == "__main__":
    key = jax.random.PRNGKey(0)
    kx, kx2, kp = jax.random.split(key, 3)

    params = init_params(kp)

    # --- case 1: single-tile path (TN == N) ------------------------------------------
    B, C, N = 2, 3, 16                 # small demo; real PointNet N ~ 1024-2500
    x = jax.random.normal(kx, (B, C, N), jnp.float32)
    out = jax.block_until_ready(stn3d_forward(x, params))
    assert out.shape == (B, 3, 3) and out.dtype == jnp.float32
    ref = _reference_forward(x, params)
    err = float(jnp.max(jnp.abs(out - ref)))
    # Loose tolerance: kernel uses bf16 operands with f32 accumulation vs f32 reference.
    assert err < 0.5, f"max |err| (single-tile) = {err}"

    # --- case 2: multi-tile path with a ragged tail (exercises accumulator + mask) ---
    N2 = 24
    x2 = jax.random.normal(kx2, (B, C, N2), jnp.float32)
    out2 = jax.block_until_ready(stn3d_forward(x2, params, tile_n=16))
    ref2 = _reference_forward(x2, params)
    err2 = float(jnp.max(jnp.abs(out2 - ref2)))
    assert err2 < 0.5, f"max |err| (multi-tile) = {err2}"

    print("KERNEL_OK")
</pallas_src>

<mosaic_0001>
module attributes {stable_mosaic.version = 11 : i64} {
  func.func @_conv_pool_kernel(%arg0: i32, %arg1: i32, %arg2: memref<1x16x3xf32, #tpu.memory_space<vmem>>, %arg3: memref<3x64xf32, #tpu.memory_space<vmem>>, %arg4: memref<1x64xf32, #tpu.memory_space<vmem>>, %arg5: memref<64x128xbf16, #tpu.memory_space<vmem>>, %arg6: memref<1x128xf32, #tpu.memory_space<vmem>>, %arg7: memref<128x1024xbf16, #tpu.memory_space<vmem>>, %arg8: memref<1x1024xf32, #tpu.memory_space<vmem>>, %arg9: memref<1x1x1024xf32, #tpu.memory_space<vmem>>) attributes {dimension_semantics = [#tpu.dimension_semantics<parallel>, #tpu.dimension_semantics<arbitrary>], iteration_bounds = array<i64: 2, 1>, scalar_prefetch = 0 : i64, scratch_operands = 0 : i64, tpu.core_type = #tpu.core_type<tc>, window_params = [{transform_indices = @transform_0, window_bounds = array<i64: 1, 16, 3>}, {pipeline_mode = #tpu.pipeline_mode<synchronous>, transform_indices = @transform_1, window_bounds = array<i64: 3, 64>}, {pipeline_mode = #tpu.pipeline_mode<synchronous>, transform_indices = @transform_2, window_bounds = array<i64: 1, 64>}, {pipeline_mode = #tpu.pipeline_mode<synchronous>, transform_indices = @transform_3, window_bounds = array<i64: 64, 128>}, {pipeline_mode = #tpu.pipeline_mode<synchronous>, transform_indices = @transform_4, window_bounds = array<i64: 1, 128>}, {pipeline_mode = #tpu.pipeline_mode<synchronous>, transform_indices = @transform_5, window_bounds = array<i64: 128, 1024>}, {pipeline_mode = #tpu.pipeline_mode<synchronous>, transform_indices = @transform_6, window_bounds = array<i64: 1, 1024>}, {transform_indices = @transform_7, window_bounds = array<i64: 1, 1, 1024>}]} {
    %c0 = arith.constant 0 : index
    %c0_0 = arith.constant 0 : index
    %c0_1 = arith.constant 0 : index
    %0 = vector.load %arg2[%c0, %c0_0, %c0_1] : memref<1x16x3xf32, #tpu.memory_space<vmem>>, vector<1x16x3xf32>
    %1 = vector.shape_cast %0 : vector<1x16x3xf32> to vector<16x3xf32>
    %c0_2 = arith.constant 0 : index
    %c0_3 = arith.constant 0 : index
    %2 = vector.load %arg3[%c0_2, %c0_3] : memref<3x64xf32, #tpu.memory_space<vmem>>, vector<3x64xf32>
    %cst = arith.constant dense<0.000000e+00> : vector<16x64xf32>
    %3 = tpu.matmul %1, %2, %cst {dimension_numbers = #tpu.dot_dimension_numbers<[1], [0], [0], [1], [0, 0, 1, 1], [], []>} : vector<16x3xf32>, vector<3x64xf32>, vector<16x64xf32> -> vector<16x64xf32>
    %c0_4 = arith.constant 0 : index
    %c0_5 = arith.constant 0 : index
    %4 = vector.load %arg4[%c0_4, %c0_5] : memref<1x64xf32, #tpu.memory_space<vmem>>, vector<1x64xf32>
    %5 = vector.broadcast %4 : vector<1x64xf32> to vector<16x64xf32>
    %6 = arith.addf %3, %5 : vector<16x64xf32>
    %cst_6 = arith.constant 0.000000e+00 : f32
    %7 = vector.broadcast %cst_6 : f32 to vector<16x64xf32>
    %8 = arith.maximumf %6, %7 : vector<16x64xf32>
    %9 = arith.truncf %8 : vector<16x64xf32> to vector<16x64xbf16>
    %c0_7 = arith.constant 0 : index
    %c0_8 = arith.constant 0 : index
    %10 = vector.load %arg5[%c0_7, %c0_8] : memref<64x128xbf16, #tpu.memory_space<vmem>>, vector<64x128xbf16>
    %cst_9 = arith.constant dense<0.000000e+00> : vector<16x128xf32>
    %11 = tpu.matmul %9, %10, %cst_9 {dimension_numbers = #tpu.dot_dimension_numbers<[1], [0], [0], [1], [0, 0, 1, 1], [], []>} : vector<16x64xbf16>, vector<64x128xbf16>, vector<16x128xf32> -> vector<16x128xf32>
    %c0_10 = arith.constant 0 : index
    %c0_11 = arith.constant 0 : index
    %12 = vector.load %arg6[%c0_10, %c0_11] : memref<1x128xf32, #tpu.memory_space<vmem>>, vector<1x128xf32>
    %13 = vector.broadcast %12 : vector<1x128xf32> to vector<16x128xf32>
    %14 = arith.addf %11, %13 : vector<16x128xf32>
    %cst_12 = arith.constant 0.000000e+00 : f32
    %15 = vector.broadcast %cst_12 : f32 to vector<16x128xf32>
    %16 = arith.maximumf %14, %15 : vector<16x128xf32>
    %17 = arith.truncf %16 : vector<16x128xf32> to vector<16x128xbf16>
    %c0_13 = arith.constant 0 : index
    %c0_14 = arith.constant 0 : index
    %18 = vector.load %arg7[%c0_13, %c0_14] : memref<128x1024xbf16, #tpu.memory_space<vmem>>, vector<128x1024xbf16>
    %cst_15 = arith.constant dense<0.000000e+00> : vector<16x1024xf32>
    %19 = tpu.matmul %17, %18, %cst_15 {dimension_numbers = #tpu.dot_dimension_numbers<[1], [0], [0], [1], [0, 0, 1, 1], [], []>} : vector<16x128xbf16>, vector<128x1024xbf16>, vector<16x1024xf32> -> vector<16x1024xf32>
    %c0_16 = arith.constant 0 : index
    %c0_17 = arith.constant 0 : index
    %20 = vector.load %arg8[%c0_16, %c0_17] : memref<1x1024xf32, #tpu.memory_space<vmem>>, vector<1x1024xf32>
    %21 = vector.broadcast %20 : vector<1x1024xf32> to vector<16x1024xf32>
    %22 = arith.addf %19, %21 : vector<16x1024xf32>
    %cst_18 = arith.constant 0.000000e+00 : f32
    %23 = vector.broadcast %cst_18 : f32 to vector<16x1024xf32>
    %24 = arith.maximumf %22, %23 : vector<16x1024xf32>
    %cst_19 = arith.constant dense<0xFF800000> : vector<1024xf32>
    %25 = vector.multi_reduction <maximumf>, %24, %cst_19 [0] : vector<16x1024xf32> to vector<1024xf32>
    %26 = vector.shape_cast %25 : vector<1024xf32> to vector<1x1024xf32>
    %c0_i32 = arith.constant 0 : i32
    %27 = arith.cmpi eq, %arg1, %c0_i32 : i32
    %28 = arith.extui %27 : i1 to i32
    %c0_i32_20 = arith.constant 0 : i32
    %29 = arith.cmpi ne, %28, %c0_i32_20 : i32
    scf.if %29 {
      %cst_27 = arith.constant 0.000000e+00 : f32
      %36 = vector.broadcast %cst_27 : f32 to vector<1x1x1024xf32>
      %c0_28 = arith.constant 0 : index
      %c0_29 = arith.constant 0 : index
      %c0_30 = arith.constant 0 : index
      %37 = vector.load %arg9[%c0_28, %c0_29, %c0_30] : memref<1x1x1024xf32, #tpu.memory_space<vmem>>, vector<1x1x1024xf32>
      tpu.vector_store %arg9[%c0_28, %c0_29, %c0_30], %36 {strides = array<i32>} : memref<1x1x1024xf32, #tpu.memory_space<vmem>>, vector<1x1x1024xf32>,
    } else {
    }
    %c0_21 = arith.constant 0 : index
    %c0_22 = arith.constant 0 : index
    %c0_23 = arith.constant 0 : index
    %30 = vector.load %arg9[%c0_21, %c0_22, %c0_23] : memref<1x1x1024xf32, #tpu.memory_space<vmem>>, vector<1x1x1024xf32>
    %31 = vector.shape_cast %30 : vector<1x1x1024xf32> to vector<1x1024xf32>
    %32 = arith.maximumf %31, %26 : vector<1x1024xf32>
    %c0_24 = arith.constant 0 : index
    %c0_25 = arith.constant 0 : index
    %c0_26 = arith.constant 0 : index
    %33 = vector.load %arg9[%c0_24, %c0_25, %c0_26] : memref<1x1x1024xf32, #tpu.memory_space<vmem>>, vector<1x1x1024xf32>
    %34 = vector.shape_cast %33 : vector<1x1x1024xf32> to vector<1x1024xf32>
    %35 = vector.shape_cast %32 : vector<1x1024xf32> to vector<1x1x1024xf32>
    tpu.vector_store %arg9[%c0_24, %c0_25, %c0_26], %35 {strides = array<i32>} : memref<1x1x1024xf32, #tpu.memory_space<vmem>>, vector<1x1x1024xf32>,
    return
  }
  func.func @transform_0(%arg0: i32, %arg1: i32) -> (i32, i32, i32) {
    %c0_i32 = arith.constant 0 : i32
    %c0_i32_0 = arith.constant 0 : i32
    return %arg0, %arg1, %c0_i32 : i32, i32, i32
  }
  func.func @transform_1(%arg0: i32, %arg1: i32) -> (i32, i32) {
    %c0_i32 = arith.constant 0 : i32
    %c0_i32_0 = arith.constant 0 : i32
    %c0_i32_1 = arith.constant 0 : i32
    return %c0_i32, %c0_i32_0 : i32, i32
  }
  func.func @transform_2(%arg0: i32, %arg1: i32) -> (i32, i32) {
    %c0_i32 = arith.constant 0 : i32
    %c0_i32_0 = arith.constant 0 : i32
    %c0_i32_1 = arith.constant 0 : i32
    return %c0_i32, %c0_i32_0 : i32, i32
  }
  func.func @transform_3(%arg0: i32, %arg1: i32) -> (i32, i32) {
    %c0_i32 = arith.constant 0 : i32
    %c0_i32_0 = arith.constant 0 : i32
    %c0_i32_1 = arith.constant 0 : i32
    return %c0_i32, %c0_i32_0 : i32, i32
  }
  func.func @transform_4(%arg0: i32, %arg1: i32) -> (i32, i32) {
    %c0_i32 = arith.constant 0 : i32
    %c0_i32_0 = arith.constant 0 : i32
    %c0_i32_1 = arith.constant 0 : i32
    return %c0_i32, %c0_i32_0 : i32, i32
  }
  func.func @transform_5(%arg0: i32, %arg1: i32) -> (i32, i32) {
    %c0_i32 = arith.constant 0 : i32
    %c0_i32_0 = arith.constant 0 : i32
    %c0_i32_1 = arith.constant 0 : i32
    return %c0_i32, %c0_i32_0 : i32, i32
  }
  func.func @transform_6(%arg0: i32, %arg1: i32) -> (i32, i32) {
    %c0_i32 = arith.constant 0 : i32
    %c0_i32_0 = arith.constant 0 : i32
    %c0_i32_1 = arith.constant 0 : i32
    return %c0_i32, %c0_i32_0 : i32, i32
  }
  func.func @transform_7(%arg0: i32, %arg1: i32) -> (i32, i32, i32) {
    %c0_i32 = arith.constant 0 : i32
    %c0_i32_0 = arith.constant 0 : i32
    %c0_i32_1 = arith.constant 0 : i32
    return %arg0, %c0_i32, %c0_i32_0 : i32, i32, i32
  }
}

</mosaic_0001>

<llo_original>
// kernel: tpu_custom_call.1
$region0: #{tpu_custom_call.1}
  #allocation0 [shape = 'u32[]', space=smem, size = 0x4, offset = 0x4, fixed_abs, tag = 'smem constant byte address 0x4 - core index']
  #allocation1 [shape = 'u32[144,128]{1,0:T(1,128)}', space=vmem, size = 0x12000, scoped, tag = 'internal scratch']
  %s0 = inlined_call_operand.vmem [shape: f32[2,16,3], index: 0, kind: input, shape index: {}]
  %s1 = inlined_call_operand.vmem [shape: f32[3,64], index: 1, kind: input, shape index: {}]
  %s2 = inlined_call_operand.vmem [shape: f32[1,64], index: 2, kind: input, shape index: {}]
  %s3 = inlined_call_operand.vmem [shape: bf16[64,128], index: 3, kind: input, shape index: {}]
  %s4 = inlined_call_operand.vmem [shape: f32[1,128], index: 4, kind: input, shape index: {}]
  %s5 = inlined_call_operand.hbm [shape: bf16[128,1024], index: 5, kind: input, shape index: {}]
  %s6 = inlined_call_operand.vmem [shape: f32[1,1024], index: 6, kind: input, shape index: {}]
  %s7 = inlined_call_operand.hbm [shape: f32[2,1,1024], index: 7, kind: output, shape index: {}]
  %s8 = sld [smem:[#allocation0]]
  $region69: #{tpu_custom_call.1} parent=0
    _
  %s10 = ssub.s32 1, %s8
  %s11 = scalar_select 0, %s10, %s8
  $region1: #{tpu_custom_call.1} parent=0
    #allocation2 [shape = 'u8[262144]{0}', space=vmem, size = 0x40000, scoped, tag = 'input window, operand 5, single buffered']
    #allocation3 [shape = 's32[2]{0}', space=sflag, size = 0x8, scoped, tag = 'scoped memory for tpu_custom_call.1']
    #allocation4 [shape = 's32[2]{0}', space=sflag, size = 0x8, scoped, tag = 'scoped memory for tpu_custom_call.1']
    #allocation5 [shape = 'u8[8192]{0}', space=vmem, size = 0x2000, scoped, tag = 'output window, operand 0']
    %12 = vsyncpa [#allocation3], 0
    %13 = vsyncpa [#allocation4], 0
    %s14 = scalar_lea.sflag [#allocation4], 1
    %15 = vsyncpa %s14, 0
    loop: start=0, step=1, limit=4
    $region2: #{tpu_custom_call.1} parent=1 // loop_pre_header
      _
    $region3: #{tpu_custom_call.1} parent=1 // loop_header
      %s17 = sphi 0, %s21
      %p18 = scmp.ge.s32.totalorder %s17, 4
      %s24 = sphi 0, %s36
      %s25 = sphi 0, %s32
      %s26 = sphi 0, %s24
      %s27 = sphi 0, %s25
      %s28 = sphi 0, %s26
      %s29 = sphi 0, %s27
      %s41 = sphi 0, %s43
      %s44 = sphi 0, %s41
      %s45 = sphi 0, %s44
      %s61 = sphi 0, %s45
      %s65 = sphi 0, %s65
      %s67 = sphi 0, %s65
      %s68 = sphi 0, %s67
      %s82 = sphi 0, %s68
      %s86 = sphi 0, %s86
      %s88 = sphi 0, %s86
      %s89 = sphi 0, %s88
      %s103 = sphi 0, %s89
      %s107 = sphi 0, %s107
      %s109 = sphi 0, %s107
      %s110 = sphi 0, %s109
      %s124 = sphi 0, %s110
      %s128 = sphi 0, %s128
      %s130 = sphi 0, %s128
      %s131 = sphi 0, %s130
      %s145 = sphi 0, %s131
      %s149 = sphi 0, %s149
      %s151 = sphi 0, %s149
      %s152 = sphi 0, %s151
      %s166 = sphi 0, %s152
      %s170 = sphi 0, %s170
      %s172 = sphi 0, %s170
      %s173 = sphi 0, %s172
      %s187 = sphi 0, %s173
      %s193 = sphi 0, %s195
      %s196 = sphi 0, %s193
      %s197 = sphi 0, %s196
      %s213 = sphi 0, %s197
    $region4: #{tpu_custom_call.1} parent=1 // loop_header_branch
      %20 = sbr.rel (%p18) target = $region8
    $region5: #{tpu_custom_call.1} parent=1 // loop_body
      %s22 = ssub.s32 %s17, 1
      %s23 = ssub.s32 %s17, 2
      %s30 = sadd.s32 1, %s25
      %p31 = scmp.ge.s32.totalorder %s30, 1
      %s32 = scalar_select %p31, 0, %s30
      %s33 = sadd.s32 1, %s24
      %s34 = scalar_select %p31, %s33, %s24
      %p35 = scmp.ge.s32.totalorder %s34, 2
      %s36 = scalar_select %p35, 0, %s34
      %s37 = ssub.s32 %s24, %s36
      %s38 = ssub.s32 %s25, %s32
      %s39 = sor.u32 %s37, %s38
      %p40 = scmp.eq.s32.totalorder %s39, 0
      %s42 = sadd.s32 %s41, 1
      %s43 = scalar_select %p40, %s41, %s42
      %p46 = pneg %p40
      %p47 = scmp.eq.s32.totalorder %s17, 1
      %p48 = por %p46, %p47
      %p49 = scmp.ne.s32.totalorder %s41, %s44
      %p50 = scmp.eq.s32.totalorder %s17, 0
      %p51 = por %p49, %p50
      %p52 = scmp.ne.s32.totalorder %s41, %s44
      %p53 = scmp.eq.s32.totalorder %s22, 1
      %p54 = por %p52, %p53
      %p55 = scmp.ne.s32.totalorder %s44, %s45
      %p56 = scmp.eq.s32.totalorder %s22, 0
      %p57 = por %p55, %p56
      %p58 = scmp.ne.s32.totalorder %s44, %s45
      %p59 = scmp.eq.s32.totalorder %s23, 1
      %p60 = por %p58, %p59
      %p62 = scmp.ne.s32.totalorder %s45, %s61
      %p63 = scmp.eq.s32.totalorder %s23, 0
      %p64 = por %p62, %p63
      %s66 = sadd.s32 %s65, 1
      %p69 = scmp.eq.s32.totalorder %s17, 1
      %p70 = scmp.ne.s32.totalorder %s65, %s67
      %p71 = scmp.eq.s32.totalorder %s17, 0
      %p72 = por %p70, %p71
      %p73 = scmp.ne.s32.totalorder %s65, %s67
      %p74 = scmp.eq.s32.totalorder %s22, 1
      %p75 = por %p73, %p74
      %p76 = scmp.ne.s32.totalorder %s67, %s68
      %p77 = scmp.eq.s32.totalorder %s22, 0
      %p78 = por %p76, %p77
      %p79 = scmp.ne.s32.totalorder %s67, %s68
      %p80 = scmp.eq.s32.totalorder %s23, 1
      %p81 = por %p79, %p80
      %p83 = scmp.ne.s32.totalorder %s68, %s82
      %p84 = scmp.eq.s32.totalorder %s23, 0
      %p85 = por %p83, %p84
      %s87 = sadd.s32 %s86, 1
      %p90 = scmp.eq.s32.totalorder %s17, 1
      %p91 = scmp.ne.s32.totalorder %s86, %s88
      %p92 = scmp.eq.s32.totalorder %s17, 0
      %p93 = por %p91, %p92
      %p94 = scmp.ne.s32.totalorder %s86, %s88
      %p95 = scmp.eq.s32.totalorder %s22, 1
      %p96 = por %p94, %p95
      %p97 = scmp.ne.s32.totalorder %s88, %s89
      %p98 = scmp.eq.s32.totalorder %s22, 0
      %p99 = por %p97, %p98
      %p100 = scmp.ne.s32.totalorder %s88, %s89
      %p101 = scmp.eq.s32.totalorder %s23, 1
      %p102 = por %p100, %p101
      %p104 = scmp.ne.s32.totalorder %s89, %s103
      %p105 = scmp.eq.s32.totalorder %s23, 0
      %p106 = por %p104, %p105
      %s108 = sadd.s32 %s107, 1
      %p111 = scmp.eq.s32.totalorder %s17, 1
      %p112 = scmp.ne.s32.totalorder %s107, %s109
      %p113 = scmp.eq.s32.totalorder %s17, 0
      %p114 = por %p112, %p113
      %p115 = scmp.ne.s32.totalorder %s107, %s109
      %p116 = scmp.eq.s32.totalorder %s22, 1
      %p117 = por %p115, %p116
      %p118 = scmp.ne.s32.totalorder %s109, %s110
      %p119 = scmp.eq.s32.totalorder %s22, 0
      %p120 = por %p118, %p119
      %p121 = scmp.ne.s32.totalorder %s109, %s110
      %p122 = scmp.eq.s32.totalorder %s23, 1
      %p123 = por %p121, %p122
      %p125 = scmp.ne.s32.totalorder %s110, %s124
      %p126 = scmp.eq.s32.totalorder %s23, 0
      %p127 = por %p125, %p126
      %s129 = sadd.s32 %s128, 1
      %p132 = scmp.eq.s32.totalorder %s17, 1
      %p133 = scmp.ne.s32.totalorder %s128, %s130
      %p134 = scmp.eq.s32.totalorder %s17, 0
      %p135 = por %p133, %p134
      %p136 = scmp.ne.s32.totalorder %s128, %s130
      %p137 = scmp.eq.s32.totalorder %s22, 1
      %p138 = por %p136, %p137
      %p139 = scmp.ne.s32.totalorder %s130, %s131
      %p140 = scmp.eq.s32.totalorder %s22, 0
      %p141 = por %p139, %p140
      %p142 = scmp.ne.s32.totalorder %s130, %s131
      %p143 = scmp.eq.s32.totalorder %s23, 1
      %p144 = por %p142, %p143
      %p146 = scmp.ne.s32.totalorder %s131, %s145
      %p147 = scmp.eq.s32.totalorder %s23, 0
      %p148 = por %p146, %p147
      %s150 = sadd.s32 %s149, 1
      %p153 = scmp.eq.s32.totalorder %s17, 1
      %p154 = scmp.ne.s32.totalorder %s149, %s151
      %p155 = scmp.eq.s32.totalorder %s17, 0
      %p156 = por %p154, %p155
      %p157 = scmp.ne.s32.totalorder %s149, %s151
      %p158 = scmp.eq.s32.totalorder %s22, 1
      %p159 = por %p157, %p158
      %p160 = scmp.ne.s32.totalorder %s151, %s152
      %p161 = scmp.eq.s32.totalorder %s22, 0
      %p162 = por %p160, %p161
      %p163 = scmp.ne.s32.totalorder %s151, %s152
      %p164 = scmp.eq.s32.totalorder %s23, 1
      %p165 = por %p163, %p164
      %p167 = scmp.ne.s32.totalorder %s152, %s166
      %p168 = scmp.eq.s32.totalorder %s23, 0
      %p169 = por %p167, %p168
      %s171 = sadd.s32 %s170, 1
      %p174 = scmp.eq.s32.totalorder %s17, 1
      %p175 = scmp.ne.s32.totalorder %s170, %s172
      %p176 = scmp.eq.s32.totalorder %s17, 0
      %p177 = por %p175, %p176
      %p178 = scmp.ne.s32.totalorder %s170, %s172
      %p179 = scmp.eq.s32.totalorder %s22, 1
      %p180 = por %p178, %p179
      %p181 = scmp.ne.s32.totalorder %s172, %s173
      %p182 = scmp.eq.s32.totalorder %s22, 0
      %p183 = por %p181, %p182
      %p184 = scmp.ne.s32.totalorder %s172, %s173
      %p185 = scmp.eq.s32.totalorder %s23, 1
      %p186 = por %p184, %p185
      %p188 = scmp.ne.s32.totalorder %s173, %s187
      %p189 = scmp.eq.s32.totalorder %s23, 0
      %p190 = por %p188, %p189
      %s191 = ssub.s32 %s24, %s36
      %p192 = scmp.eq.s32.totalorder %s191, 0
      %s194 = sadd.s32 %s193, 1
      %s195 = scalar_select %p192, %s193, %s194
      %p198 = pneg %p192
      %p199 = scmp.eq.s32.totalorder %s17, 1
      %p200 = por %p198, %p199
      %p201 = scmp.ne.s32.totalorder %s193, %s196
      %p202 = scmp.eq.s32.totalorder %s17, 0
      %p203 = por %p201, %p202
      %p204 = scmp.ne.s32.totalorder %s193, %s196
      %p205 = scmp.eq.s32.totalorder %s22, 1
      %p206 = por %p204, %p205
      %p207 = scmp.ne.s32.totalorder %s196, %s197
      %p208 = scmp.eq.s32.totalorder %s22, 0
      %p209 = por %p207, %p208
      %p210 = scmp.ne.s32.totalorder %s196, %s197
      %p211 = scmp.eq.s32.totalorder %s23, 1
      %p212 = por %p210, %p211
      %p214 = scmp.ne.s32.totalorder %s197, %s213
      %p215 = scmp.eq.s32.totalorder %s23, 0
      %p216 = por %p214, %p215
      %p217 = scmp.le.s32.totalorder 1, %s17
      %p218 = scmp.lt.s32.totalorder %s17, 3
      %p219 = pnand %p217, %p218
      %p220 = pneg %p219
      // Predicated region
      $region9: #{tpu_custom_call.1} parent=5 // pred_check
        _
      $region10: #{tpu_custom_call.1} parent=5 // pred_check_branch
        %222 = sbr.rel (%p219) target = $region12
      $region11: #{tpu_custom_call.1} parent=5 // pred_region
        %s223 = ssub.s32 %s17, 1
        // Predicated region
        $region13: #{tpu_custom_call.1} parent=11 // pred_check
          %p224 = pneg %p78
        $region14: #{tpu_custom_call.1} parent=11 // pred_check_branch
          %226 = sbr.rel (%p224) target = $region16
        $region15: #{tpu_custom_call.1} parent=11 // pred_region
          _
        $region16: #{tpu_custom_call.1} parent=11 // pred_fallthru
          _
        // Predicated region
        $region17: #{tpu_custom_call.1} parent=11 // pred_check
          %p227 = pneg %p99
        $region18: #{tpu_custom_call.1} parent=11 // pred_check_branch
          %229 = sbr.rel (%p227) target = $region20
        $region19: #{tpu_custom_call.1} parent=11 // pred_region
          _
        $region20: #{tpu_custom_call.1} parent=11 // pred_fallthru
          _
        // Predicated region
        $region21: #{tpu_custom_call.1} parent=11 // pred_check
          %p230 = pneg %p120
        $region22: #{tpu_custom_call.1} parent=11 // pred_check_branch
          %232 = sbr.rel (%p230) target = $region24
        $region23: #{tpu_custom_call.1} parent=11 // pred_region
          _
        $region24: #{tpu_custom_call.1} parent=11 // pred_fallthru
          _
        // Predicated region
        $region25: #{tpu_custom_call.1} parent=11 // pred_check
          %p233 = pneg %p141
        $region26: #{tpu_custom_call.1} parent=11 // pred_check_branch
          %235 = sbr.rel (%p233) target = $region28
        $region27: #{tpu_custom_call.1} parent=11 // pred_region
          _
        $region28: #{tpu_custom_call.1} parent=11 // pred_fallthru
          _
        // Predicated region
        $region29: #{tpu_custom_call.1} parent=11 // pred_check
          %p236 = pneg %p162
        $region30: #{tpu_custom_call.1} parent=11 // pred_check_branch
          %238 = sbr.rel (%p236) target = $region32
        $region31: #{tpu_custom_call.1} parent=11 // pred_region
          %s240 = ssub.s32 8192, 8192
          %241 = vsyncadd [#allocation3], %s240
          %s242 = sshll.u32 [#allocation2], 4
          %s243 = int_to_ptr.vmem [resolvable:$true] %s242
          %248 = dma.hbm_to_vmem [thread:$0]  %s5, 8192, %s243, [#allocation3], 512, 512, 32
        $region32: #{tpu_custom_call.1} parent=11 // pred_fallthru
          _
        // Predicated region
        $region33: #{tpu_custom_call.1} parent=11 // pred_check
          %p249 = pneg %p183
        $region34: #{tpu_custom_call.1} parent=11 // pred_check_branch
          %251 = sbr.rel (%p249) target = $region36
        $region35: #{tpu_custom_call.1} parent=11 // pred_region
          _
        $region36: #{tpu_custom_call.1} parent=11 // pred_fallthru
          _
      $region12: #{tpu_custom_call.1} parent=5 // pred_fallthru
        _
      %p252 = scmp.lt.s32.totalorder %s17, 2
      // Predicated region
      $region37: #{tpu_custom_call.1} parent=5 // pred_check
        %p253 = pneg %p252
      $region38: #{tpu_custom_call.1} parent=5 // pred_check_branch
        %255 = sbr.rel (%p253) target = $region40
      $region39: #{tpu_custom_call.1} parent=5 // pred_region
        // Predicated region
        $region41: #{tpu_custom_call.1} parent=39 // pred_check
          %p256 = pneg %p51
        $region42: #{tpu_custom_call.1} parent=39 // pred_check_branch
          %258 = sbr.rel (%p256) target = $region44
        $region43: #{tpu_custom_call.1} parent=39 // pred_region
          %s259 = smul.u32 2, %s25
          %p260 = scmp.lt.s32.totalorder %s24, 1
          %s261 = scalar_select %p260, %s24, 1
          %p262 = scmp.lt.s32.totalorder %s259, 1
          %s263 = scalar_select %p262, %s259, 1
          %s264 = smul.addr %s261, 2
          %s265 = sadd.s32 %s263, %s264
          %s266 = smul.addr %s265, 8
          %s267 = scalar_lea.vmem %s0, %s266
          %s268 = smul.u32 2, %s25
        $region44: #{tpu_custom_call.1} parent=39 // pred_fallthru
          _
      $region40: #{tpu_custom_call.1} parent=5 // pred_fallthru
        _
      %p269 = scmp.le.s32.totalorder 1, %s17
      %p270 = scmp.lt.s32.totalorder %s17, 3
      %p271 = pnand %p269, %p270
      %p272 = pneg %p271
      // Predicated region
      $region45: #{tpu_custom_call.1} parent=5 // pred_check
        _
      $region46: #{tpu_custom_call.1} parent=5 // pred_check_branch
        %274 = sbr.rel (%p271) target = $region48
      $region47: #{tpu_custom_call.1} parent=5 // pred_region
        %s275 = ssub.s32 %s17, 1
        // Predicated region
        $region49: #{tpu_custom_call.1} parent=47 // pred_check
          %p276 = pneg %p162
        $region50: #{tpu_custom_call.1} parent=47 // pred_check_branch
          %278 = sbr.rel (%p276) target = $region52
        $region51: #{tpu_custom_call.1} parent=47 // pred_region
          %279 = dma.done [#allocation3], 8192
        $region52: #{tpu_custom_call.1} parent=47 // pred_fallthru
          _
        %s280 = smul.u32 2, %s27
        %p281 = scmp.lt.s32.totalorder %s26, 1
        %s282 = scalar_select %p281, %s26, 1
        %p283 = scmp.lt.s32.totalorder %s280, 1
        %s284 = scalar_select %p283, %s280, 1
        %s285 = smul.addr %s282, 2
        %s286 = sadd.s32 %s284, %s285
        %s287 = smul.addr %s286, 8
        %s288 = scalar_lea.vmem %s0, %s287
        %p289 = pneg %p57
        %p290 = pneg %p54
        %p291 = pneg %p78
        %p292 = pneg %p75
        %p293 = pneg %p99
        %p294 = pneg %p96
        %p295 = pneg %p120
        %p296 = pneg %p117
        %p297 = pneg %p141
        %p298 = pneg %p138
        %p299 = pneg %p162
        %p300 = pneg %p159
        %p301 = pneg %p183
        %p302 = pneg %p180
        %p303 = pneg %p209
        %p304 = pneg %p206
        %s305 = sand.u32 %s196, 1
        %s306 = scalar_lea.sflag [#allocation4], %s305
        %s307 = sand.u32 %s196, 1
        %s308 = smul.addr %s307, 8
        %s309 = scalar_lea.vmem [#allocation5], %s308
        %s310 = smul.u32 2, %s27
        %p311 = scmp.lt.s32.totalorder %s26, 1
        %s312 = scalar_select %p311, %s26, 1
        %p313 = scmp.lt.s32.totalorder %s310, 1
        %s314 = scalar_select %p313, %s310, 1
        %s315 = smul.addr %s312, 2
        %s316 = sadd.s32 %s314, %s315
        %s317 = smul.addr %s316, 8
        %s318 = scalar_lea.vmem %s0, %s317
        %s319 = smul.u32 2, %s27
        %v321 = vld [vmem:[%s318] sm:$0xff]
        %v322 = vld [vmem:[%s318 + $0x8] sm:$0xff]
        %v323 = vld [vmem:[%s1] sm:$0x7]
        %v324 = vld [vmem:[%s2] sm:$0x1]
        %v326 = vlaneseq
        %v327 = vshrl.u32 %v326, 7
        %v328 = vsub.s32 0, %v327
        %v329 = vrot.slane %v324, %v328
        %vm331 = vcmask 23552
        %v333 = vsel %vm331, %v321, 0
        %v336 = vsel %vm331, %v322, 0
        %vm338 = vcmask 1042432
        %v340 = vsel %vm338, %v323, 0
        %342 = vmatprep.subr.mxu0 0.0
        %343 = vmatpush1.msra.mxu0 %v340
        %344 = vmatprep.subr.mxu0 0.0
        %345 = vmatpush1.msra.mxu0 0.0
        %346 = vmatprep.subr.mxu0 0.0
        %347 = vmatpush1.msra.mxu0 0.0
        %348 = vmatprep.subr.mxu0 0.0
        %349 = vmatpush1.msra.mxu0 0.0
        %350 = vmatprep.subr.mxu0 0.0
        %351 = vmatpush1.msra.mxu0 0.0
        %352 = vmatprep.subr.mxu0 0.0
        %353 = vmatpush1.msra.mxu0 0.0
        %354 = vmatprep.subr.mxu0 0.0
        %355 = vmatpush1.msra.mxu0 0.0
        %356 = vmatprep.subr.mxu0 0.0
        %357 = vmatpush1.msra.mxu0 0.0
        %358 = vmatprep.subr.mxu0 0.0
        %359 = vmatpush1.msra.mxu0 0.0
        %360 = vmatprep.subr.mxu0 0.0
        %361 = vmatpush1.msra.mxu0 0.0
        %362 = vmatprep.subr.mxu0 0.0
        %363 = vmatpush1.msra.mxu0 0.0
        %364 = vmatprep.subr.mxu0 0.0
        %365 = vmatpush1.msra.mxu0 0.0
        %366 = vmatprep.subr.mxu0 0.0
        %367 = vmatpush1.msra.mxu0 0.0
        %368 = vmatprep.subr.mxu0 0.0
        %369 = vmatpush1.msra.mxu0 0.0
        %370 = vmatprep.subr.mxu0 0.0
        %371 = vmatpush1.msra.mxu0 0.0
        %372 = vmatprep.subr.mxu0 0.0
        %373 = vmatpush1.msra.mxu0 0.0
        %374 = vmatprep.subr.mxu0 0.0
        %375 = vmatpush1.msra.mxu0 0.0
        %376 = vmatprep.subr.mxu0 0.0
        %377 = vmatpush1.msra.mxu0 0.0
        %378 = vmatprep.subr.mxu0 0.0
        %379 = vmatpush1.msra.mxu0 0.0
        %380 = vmatprep.subr.mxu0 0.0
        %381 = vmatpush1.msra.mxu0 0.0
        %382 = vmatprep.subr.mxu0 0.0
        %383 = vmatpush1.msra.mxu0 0.0
        %384 = vmatprep.subr.mxu0 0.0
        %385 = vmatpush1.msra.mxu0 0.0
        %386 = vmatprep.subr.mxu0 0.0
        %387 = vmatpush1.msra.mxu0 0.0
        %388 = vmatprep.subr.mxu0 0.0
        %389 = vmatpush1.msra.mxu0 0.0
        %390 = vmatprep.subr.mxu0 0.0
        %391 = vmatpush1.msra.mxu0 0.0
        %392 = vmatprep.subr.mxu0 0.0
        %393 = vmatpush1.msra.mxu0 0.0
        %394 = vmatprep.subr.mxu0 0.0
        %395 = vmatpush1.msra.mxu0 0.0
        %396 = vmatprep.subr.mxu0 0.0
        %397 = vmatpush1.msra.mxu0 0.0
        %398 = vmatprep.subr.mxu0 0.0
        %399 = vmatpush1.msra.mxu0 0.0
        %400 = vmatprep.subr.mxu0 0.0
        %401 = vmatpush1.msra.mxu0 0.0
        %402 = vmatprep.subr.mxu0 0.0
        %403 = vmatpush1.msra.mxu0 0.0
        %404 = vmatprep.subr.mxu0 0.0
        %405 = vmatpush1.msra.mxu0 0.0
        %406 = vmatprep.mubr.f32.mxu0 0.0
        %407 = vmatmul.mubr.f32.gmra.mrb[0].mxu0 %v333
        %v408 = vpop.f32.mrb[0].mxu0
        %v409 = vadd.f32 %v329, %v408
        %v410 = vpop.f32.mrb[0].mxu0
        %411 = vmatprep.mubr.f32.mxu0 0.0
        %412 = vmatmul.mubr.f32.gmra.mrb[0].mxu0 %v336
        %v413 = vpop.f32.mrb[0].mxu0
        %v414 = vadd.f32 %v329, %v413
        %v415 = vpop.f32.mrb[0].mxu0
        %416 = vdwg.mxu0
        %v417 = vmax.f32 %v409, 0.0
        %v418 = vmax.f32 %v414, 0.0
        %v419 = vpack.c.bf16 %v418, %v417
        %v420 = vld [vmem:[%s3] sm:$0xf]
        %v421 = vld [vmem:[%s3 + $0x4] sm:$0xf]
        %v422 = vld [vmem:[%s3 + $0x8] sm:$0xf]
        %v423 = vld [vmem:[%s3 + $0xc] sm:$0xf]
        %v424 = vld [vmem:[%s3 + $0x10] sm:$0xf]
        %v425 = vld [vmem:[%s3 + $0x14] sm:$0xf]
        %v426 = vld [vmem:[%s3 + $0x18] sm:$0xf]
        %v427 = vld [vmem:[%s3 + $0x1c] sm:$0xf]
        %v428 = vld [vmem:[%s4] sm:$0x1]
        %v430 = vlaneseq
        %v431 = vshrl.u32 %v430, 7
        %v432 = vsub.s32 0, %v431
        %v433 = vrot.slane %v428, %v432
        %v443 = vunpack.c.l.b16 %v420
        %v444 = vunpack.c.l.b16 %v421
        %v445 = vunpack.c.l.b16 %v422
        %v446 = vunpack.c.l.b16 %v423
        %v447 = vunpack.c.l.b16 %v424
        %v448 = vunpack.c.l.b16 %v425
        %v449 = vunpack.c.l.b16 %v426
        %v450 = vunpack.c.l.b16 %v427
        %v451 = vpack.c.b16 %v444, %v443
        %v452 = vpack.c.b16 %v446, %v445
        %v453 = vpack.c.b16 %v448, %v447
        %v454 = vpack.c.b16 %v450, %v449
        %vm459 = vcmask 523264
        %v461 = vsel %vm459, %v419, 0
        %463 = vmatprep.subr.bf16.mxu0 0
        %464 = vmatpush1.bf16.msra.mxu0 %v451
        %465 = vmatprep.subr.bf16.mxu0 0
        %466 = vmatpush1.bf16.msra.mxu0 %v452
        %467 = vmatprep.subr.bf16.mxu0 0
        %468 = vmatpush1.bf16.msra.mxu0 %v453
        %469 = vmatprep.subr.bf16.mxu0 0
        %470 = vmatpush1.bf16.msra.mxu0 %v454
        %471 = vmatprep.subr.bf16.mxu0 0
        %472 = vmatpush1.bf16.msra.mxu0 0
        %473 = vmatprep.subr.bf16.mxu0 0
        %474 = vmatpush1.bf16.msra.mxu0 0
        %475 = vmatprep.subr.bf16.mxu0 0
        %476 = vmatpush1.bf16.msra.mxu0 0
        %477 = vmatprep.subr.bf16.mxu0 0
        %478 = vmatpush1.bf16.msra.mxu0 0
        %479 = vmatprep.subr.bf16.mxu0 0
        %480 = vmatpush1.bf16.msra.mxu0 0
        %481 = vmatprep.subr.bf16.mxu0 0
        %482 = vmatpush1.bf16.msra.mxu0 0
        %483 = vmatprep.subr.bf16.mxu0 0
        %484 = vmatpush1.bf16.msra.mxu0 0
        %485 = vmatprep.subr.bf16.mxu0 0
        %486 = vmatpush1.bf16.msra.mxu0 0
        %487 = vmatprep.subr.bf16.mxu0 0
        %488 = vmatpush1.bf16.msra.mxu0 0
        %489 = vmatprep.subr.bf16.mxu0 0
        %490 = vmatpush1.bf16.msra.mxu0 0
        %491 = vmatprep.subr.bf16.mxu0 0
        %492 = vmatpush1.bf16.msra.mxu0 0
        %493 = vmatprep.subr.bf16.mxu0 0
        %494 = vmatpush1.bf16.msra.mxu0 0
        %495 = vmatprep.mubr.bf16.mxu0 0
        %496 = vmatmul.mubr.bf16.gmra.mrb[0].mxu0 %v461
        %v497 = vpop.f32.mrb[0].mxu0
        %v498 = vadd.f32 %v433, %v497
        %v499 = vpop.f32.mrb[0].mxu0
        %v500 = vpop.f32.mrb[0].mxu0
        %v501 = vadd.f32 %v433, %v500
        %v502 = vpop.f32.mrb[0].mxu0
        %503 = vdwg.mxu0
        %v504 = vmax.f32 %v498, 0.0
        %v505 = vmax.f32 %v501, 0.0
        %v506 = vpack.c.bf16 %v505, %v504
        %v507 = vld [vmem:[#allocation2] sm:$0xff]
        %v508 = vld [vmem:[#allocation2 + $0x8] sm:$0xff]
        %v509 = vld [vmem:[#allocation2 + $0x10] sm:$0xff]
        %v510 = vld [vmem:[#allocation2 + $0x18] sm:$0xff]
        %v511 = vld [vmem:[#allocation2 + $0x20] sm:$0xff]
        %v512 = vld [vmem:[#allocation2 + $0x28] sm:$0xff]
        %v513 = vld [vmem:[#allocation2 + $0x30] sm:$0xff]
        %v514 = vld [vmem:[#allocation2 + $0x38] sm:$0xff]
        %v515 = vld [vmem:[#allocation2 + $0x40] sm:$0xff]
        %v516 = vld [vmem:[#allocation2 + $0x48] sm:$0xff]
        %v517 = vld [vmem:[#allocation2 + $0x50] sm:$0xff]
        %v518 = vld [vmem:[#allocation2 + $0x58] sm:$0xff]
        %v519 = vld [vmem:[#allocation2 + $0x60] sm:$0xff]
        %v520 = vld [vmem:[#allocation2 + $0x68] sm:$0xff]
        %v521 = vld [vmem:[#allocation2 + $0x70] sm:$0xff]
        %v522 = vld [vmem:[#allocation2 + $0x78] sm:$0xff]
        %v523 = vld [vmem:[#allocation2 + $0x80] sm:$0xff]
        %v524 = vld [vmem:[#allocation2 + $0x88] sm:$0xff]
        %v525 = vld [vmem:[#allocation2 + $0x90] sm:$0xff]
        %v526 = vld [vmem:[#allocation2 + $0x98] sm:$0xff]
        %v527 = vld [vmem:[#allocation2 + $0xa0] sm:$0xff]
        %v528 = vld [vmem:[#allocation2 + $0xa8] sm:$0xff]
        %v529 = vld [vmem:[#allocation2 + $0xb0] sm:$0xff]
        %v530 = vld [vmem:[#allocation2 + $0xb8] sm:$0xff]
        %v531 = vld [vmem:[#allocation2 + $0xc0] sm:$0xff]
        %v532 = vld [vmem:[#allocation2 + $0xc8] sm:$0xff]
        %v533 = vld [vmem:[#allocation2 + $0xd0] sm:$0xff]
        %v534 = vld [vmem:[#allocation2 + $0xd8] sm:$0xff]
        %v535 = vld [vmem:[#allocation2 + $0xe0] sm:$0xff]
        %v536 = vld [vmem:[#allocation2 + $0xe8] sm:$0xff]
        %v537 = vld [vmem:[#allocation2 + $0xf0] sm:$0xff]
        %v538 = vld [vmem:[#allocation2 + $0xf8] sm:$0xff]
        %v539 = vld [vmem:[#allocation2 + $0x100] sm:$0xff]
        %v540 = vld [vmem:[#allocation2 + $0x108] sm:$0xff]
        %v541 = vld [vmem:[#allocation2 + $0x110] sm:$0xff]
        %v542 = vld [vmem:[#allocation2 + $0x118] sm:$0xff]
        %v543 = vld [vmem:[#allocation2 + $0x120] sm:$0xff]
        %v544 = vld [vmem:[#allocation2 + $0x128] sm:$0xff]
        %v545 = vld [vmem:[#allocation2 + $0x130] sm:$0xff]
        %v546 = vld [vmem:[#allocation2 + $0x138] sm:$0xff]
        %v547 = vld [vmem:[#allocation2 + $0x140] sm:$0xff]
        %v548 = vld [vmem:[#allocation2 + $0x148] sm:$0xff]
        %v549 = vld [vmem:[#allocation2 + $0x150] sm:$0xff]
        %v550 = vld [vmem:[#allocation2 + $0x158] sm:$0xff]
        %v551 = vld [vmem:[#allocation2 + $0x160] sm:$0xff]
        %v552 = vld [vmem:[#allocation2 + $0x168] sm:$0xff]
        %v553 = vld [vmem:[#allocation2 + $0x170] sm:$0xff]
        %v554 = vld [vmem:[#allocation2 + $0x178] sm:$0xff]
        %v555 = vld [vmem:[#allocation2 + $0x180] sm:$0xff]
        %v556 = vld [vmem:[#allocation2 + $0x188] sm:$0xff]
        %v557 = vld [vmem:[#allocation2 + $0x190] sm:$0xff]
        %v558 = vld [vmem:[#allocation2 + $0x198] sm:$0xff]
        %v559 = vld [vmem:[#allocation2 + $0x1a0] sm:$0xff]
        %v560 = vld [vmem:[#allocation2 + $0x1a8] sm:$0xff]
        %v561 = vld [vmem:[#allocation2 + $0x1b0] sm:$0xff]
        %v562 = vld [vmem:[#allocation2 + $0x1b8] sm:$0xff]
        %v563 = vld [vmem:[#allocation2 + $0x1c0] sm:$0xff]
        %v564 = vld [vmem:[#allocation2 + $0x1c8] sm:$0xff]
        %v565 = vld [vmem:[#allocation2 + $0x1d0] sm:$0xff]
        %v566 = vld [vmem:[#allocation2 + $0x1d8] sm:$0xff]
        %v567 = vld [vmem:[#allocation2 + $0x1e0] sm:$0xff]
        %v568 = vld [vmem:[#allocation2 + $0x1e8] sm:$0xff]
        %v569 = vld [vmem:[#allocation2 + $0x1f0] sm:$0xff]
        %v570 = vld [vmem:[#allocation2 + $0x1f8] sm:$0xff]
        %v571 = vld [vmem:[%s6] sm:$0xff]
        %v573 = vlaneseq
        %v574 = vshrl.u32 %v573, 7
        %v575 = vsub.s32 0, %v574
        %v576 = vrot.slane %v571, %v575
        %v577 = vlaneseq
        %v578 = vshrl.u32 %v577, 7
        %v579 = vsub.s32 1, %v578
        %v580 = vrot.slane %v571, %v579
        %v581 = vlaneseq
        %v582 = vshrl.u32 %v581, 7
        %v583 = vsub.s32 2, %v582
        %v584 = vrot.slane %v571, %v583
        %v585 = vlaneseq
        %v586 = vshrl.u32 %v585, 7
        %v587 = vsub.s32 3, %v586
        %v588 = vrot.slane %v571, %v587
        %v589 = vlaneseq
        %v590 = vshrl.u32 %v589, 7
        %v591 = vsub.s32 4, %v590
        %v592 = vrot.slane %v571, %v591
        %v593 = vlaneseq
        %v594 = vshrl.u32 %v593, 7
        %v595 = vsub.s32 5, %v594
        %v596 = vrot.slane %v571, %v595
        %v597 = vlaneseq
        %v598 = vshrl.u32 %v597, 7
        %v599 = vsub.s32 6, %v598
        %v600 = vrot.slane %v571, %v599
        %v601 = vlaneseq
        %v602 = vshrl.u32 %v601, 7
        %v603 = vsub.s32 7, %v602
        %v604 = vrot.slane %v571, %v603
        %v677 = vunpack.c.l.b16 %v507
        %v678 = vunpack.c.h.b16 %v507
        %v679 = vunpack.c.l.b16 %v508
        %v680 = vunpack.c.h.b16 %v508
        %v681 = vunpack.c.l.b16 %v509
        %v682 = vunpack.c.h.b16 %v509
        %v683 = vunpack.c.l.b16 %v510
        %v684 = vunpack.c.h.b16 %v510
        %v685 = vunpack.c.l.b16 %v511
        %v686 = vunpack.c.h.b16 %v511
        %v687 = vunpack.c.l.b16 %v512
        %v688 = vunpack.c.h.b16 %v512
        %v689 = vunpack.c.l.b16 %v513
        %v690 = vunpack.c.h.b16 %v513
        %v691 = vunpack.c.l.b16 %v514
        %v692 = vunpack.c.h.b16 %v514
        %v693 = vunpack.c.l.b16 %v515
        %v694 = vunpack.c.h.b16 %v515
        %v695 = vunpack.c.l.b16 %v516
        %v696 = vunpack.c.h.b16 %v516
        %v697 = vunpack.c.l.b16 %v517
        %v698 = vunpack.c.h.b16 %v517
        %v699 = vunpack.c.l.b16 %v518
        %v700 = vunpack.c.h.b16 %v518
        %v701 = vunpack.c.l.b16 %v519
        %v702 = vunpack.c.h.b16 %v519
        %v703 = vunpack.c.l.b16 %v520
        %v704 = vunpack.c.h.b16 %v520
        %v705 = vunpack.c.l.b16 %v521
        %v706 = vunpack.c.h.b16 %v521
        %v707 = vunpack.c.l.b16 %v522
        %v708 = vunpack.c.h.b16 %v522
        %v709 = vunpack.c.l.b16 %v523
        %v710 = vunpack.c.h.b16 %v523
        %v711 = vunpack.c.l.b16 %v524
        %v712 = vunpack.c.h.b16 %v524
        %v713 = vunpack.c.l.b16 %v525
        %v714 = vunpack.c.h.b16 %v525
        %v715 = vunpack.c.l.b16 %v526
        %v716 = vunpack.c.h.b16 %v526
        %v717 = vunpack.c.l.b16 %v527
        %v718 = vunpack.c.h.b16 %v527
        %v719 = vunpack.c.l.b16 %v528
        %v720 = vunpack.c.h.b16 %v528
        %v721 = vunpack.c.l.b16 %v529
        %v722 = vunpack.c.h.b16 %v529
        %v723 = vunpack.c.l.b16 %v530
        %v724 = vunpack.c.h.b16 %v530
        %v725 = vunpack.c.l.b16 %v531
        %v726 = vunpack.c.h.b16 %v531
        %v727 = vunpack.c.l.b16 %v532
        %v728 = vunpack.c.h.b16 %v532
        %v729 = vunpack.c.l.b16 %v533
        %v730 = vunpack.c.h.b16 %v533
        %v731 = vunpack.c.l.b16 %v534
        %v732 = vunpack.c.h.b16 %v534
        %v733 = vunpack.c.l.b16 %v535
        %v734 = vunpack.c.h.b16 %v535
        %v735 = vunpack.c.l.b16 %v536
        %v736 = vunpack.c.h.b16 %v536
        %v737 = vunpack.c.l.b16 %v537
        %v738 = vunpack.c.h.b16 %v537
        %v739 = vunpack.c.l.b16 %v538
        %v740 = vunpack.c.h.b16 %v538
        %v741 = vunpack.c.l.b16 %v539
        %v742 = vunpack.c.h.b16 %v539
        %v743 = vunpack.c.l.b16 %v540
        %v744 = vunpack.c.h.b16 %v540
        %v745 = vunpack.c.l.b16 %v541
        %v746 = vunpack.c.h.b16 %v541
        %v747 = vunpack.c.l.b16 %v542
        %v748 = vunpack.c.h.b16 %v542
        %v749 = vunpack.c.l.b16 %v543
        %v750 = vunpack.c.h.b16 %v543
        %v751 = vunpack.c.l.b16 %v544
        %v752 = vunpack.c.h.b16 %v544
        %v753 = vunpack.c.l.b16 %v545
        %v754 = vunpack.c.h.b16 %v545
        %v755 = vunpack.c.l.b16 %v546
        %v756 = vunpack.c.h.b16 %v546
        %v757 = vunpack.c.l.b16 %v547
        %v758 = vunpack.c.h.b16 %v547
        %v759 = vunpack.c.l.b16 %v548
        %v760 = vunpack.c.h.b16 %v548
        %v761 = vunpack.c.l.b16 %v549
        %v762 = vunpack.c.h.b16 %v549
        %v763 = vunpack.c.l.b16 %v550
        %v764 = vunpack.c.h.b16 %v550
        %v765 = vunpack.c.l.b16 %v551
        %v766 = vunpack.c.h.b16 %v551
        %v767 = vunpack.c.l.b16 %v552
        %v768 = vunpack.c.h.b16 %v552
        %v769 = vunpack.c.l.b16 %v553
        %v770 = vunpack.c.h.b16 %v553
        %v771 = vunpack.c.l.b16 %v554
        %v772 = vunpack.c.h.b16 %v554
        %v773 = vunpack.c.l.b16 %v555
        %v774 = vunpack.c.h.b16 %v555
        %v775 = vunpack.c.l.b16 %v556
        %v776 = vunpack.c.h.b16 %v556
        %v777 = vunpack.c.l.b16 %v557
        %v778 = vunpack.c.h.b16 %v557
        %v779 = vunpack.c.l.b16 %v558
        %v780 = vunpack.c.h.b16 %v558
        %v781 = vunpack.c.l.b16 %v559
        %v782 = vunpack.c.h.b16 %v559
        %v783 = vunpack.c.l.b16 %v560
        %v784 = vunpack.c.h.b16 %v560
        %v785 = vunpack.c.l.b16 %v561
        %v786 = vunpack.c.h.b16 %v561
        %v787 = vunpack.c.l.b16 %v562
        %v788 = vunpack.c.h.b16 %v562
        %v789 = vunpack.c.l.b16 %v563
        %v790 = vunpack.c.h.b16 %v563
        %v791 = vunpack.c.l.b16 %v564
        %v792 = vunpack.c.h.b16 %v564
        %v793 = vunpack.c.l.b16 %v565
        %v794 = vunpack.c.h.b16 %v565
        %v795 = vunpack.c.l.b16 %v566
        %v796 = vunpack.c.h.b16 %v566
        %v797 = vunpack.c.l.b16 %v567
        %v798 = vunpack.c.h.b16 %v567
        %v799 = vunpack.c.l.b16 %v568
        %v800 = vunpack.c.h.b16 %v568
        %v801 = vunpack.c.l.b16 %v569
        %v802 = vunpack.c.h.b16 %v569
        %v803 = vunpack.c.l.b16 %v570
        %v804 = vunpack.c.h.b16 %v570
        %v805 = vpack.c.b16 %v685, %v677
        %v806 = vpack.c.b16 %v686, %v678
        %v807 = vpack.c.b16 %v687, %v679
        %v808 = vpack.c.b16 %v688, %v680
        %v809 = vpack.c.b16 %v689, %v681
        %v810 = vpack.c.b16 %v690, %v682
        %v811 = vpack.c.b16 %v691, %v683
        %v812 = vpack.c.b16 %v692, %v684
        %v813 = vpack.c.b16 %v701, %v693
        %v814 = vpack.c.b16 %v702, %v694
        %v815 = vpack.c.b16 %v703, %v695
        %v816 = vpack.c.b16 %v704, %v696
        %v817 = vpack.c.b16 %v705, %v697
        %v818 = vpack.c.b16 %v706, %v698
        %v819 = vpack.c.b16 %v707, %v699
        %v820 = vpack.c.b16 %v708, %v700
        %v821 = vpack.c.b16 %v717, %v709
        %v822 = vpack.c.b16 %v718, %v710
        %v823 = vpack.c.b16 %v719, %v711
        %v824 = vpack.c.b16 %v720, %v712
        %v825 = vpack.c.b16 %v721, %v713
        %v826 = vpack.c.b16 %v722, %v714
        %v827 = vpack.c.b16 %v723, %v715
        %v828 = vpack.c.b16 %v724, %v716
        %v829 = vpack.c.b16 %v733, %v725
        %v830 = vpack.c.b16 %v734, %v726
        %v831 = vpack.c.b16 %v735, %v727
        %v832 = vpack.c.b16 %v736, %v728
        %v833 = vpack.c.b16 %v737, %v729
        %v834 = vpack.c.b16 %v738, %v730
        %v835 = vpack.c.b16 %v739, %v731
        %v836 = vpack.c.b16 %v740, %v732
        %v837 = vpack.c.b16 %v749, %v741
        %v838 = vpack.c.b16 %v750, %v742
        %v839 = vpack.c.b16 %v751, %v743
        %v840 = vpack.c.b16 %v752, %v744
        %v841 = vpack.c.b16 %v753, %v745
        %v842 = vpack.c.b16 %v754, %v746
        %v843 = vpack.c.b16 %v755, %v747
        %v844 = vpack.c.b16 %v756, %v748
        %v845 = vpack.c.b16 %v765, %v757
        %v846 = vpack.c.b16 %v766, %v758
        %v847 = vpack.c.b16 %v767, %v759
        %v848 = vpack.c.b16 %v768, %v760
        %v849 = vpack.c.b16 %v769, %v761
        %v850 = vpack.c.b16 %v770, %v762
        %v851 = vpack.c.b16 %v771, %v763
        %v852 = vpack.c.b16 %v772, %v764
        %v853 = vpack.c.b16 %v781, %v773
        %v854 = vpack.c.b16 %v782, %v774
        %v855 = vpack.c.b16 %v783, %v775
        %v856 = vpack.c.b16 %v784, %v776
        %v857 = vpack.c.b16 %v785, %v777
        %v858 = vpack.c.b16 %v786, %v778
        %v859 = vpack.c.b16 %v787, %v779
        %v860 = vpack.c.b16 %v788, %v780
        %v861 = vpack.c.b16 %v797, %v789
        %v862 = vpack.c.b16 %v798, %v790
        %v863 = vpack.c.b16 %v799, %v791
        %v864 = vpack.c.b16 %v800, %v792
        %v865 = vpack.c.b16 %v801, %v793
        %v866 = vpack.c.b16 %v802, %v794
        %v867 = vpack.c.b16 %v803, %v795
        %v868 = vpack.c.b16 %v804, %v796
        %933 = vmatprep.subr.bf16.mxu0 %v806
        %934 = vmatpush1.bf16.msra.mxu0 %v805
        %935 = vmatprep.subr.bf16.mxu0 %v814
        %936 = vmatpush1.bf16.msra.mxu0 %v813
        %937 = vmatprep.subr.bf16.mxu0 %v822
        %938 = vmatpush1.bf16.msra.mxu0 %v821
        %939 = vmatprep.subr.bf16.mxu0 %v830
        %940 = vmatpush1.bf16.msra.mxu0 %v829
        %941 = vmatprep.subr.bf16.mxu0 %v838
        %942 = vmatpush1.bf16.msra.mxu0 %v837
        %943 = vmatprep.subr.bf16.mxu0 %v846
        %944 = vmatpush1.bf16.msra.mxu0 %v845
        %945 = vmatprep.subr.bf16.mxu0 %v854
        %946 = vmatpush1.bf16.msra.mxu0 %v853
        %947 = vmatprep.subr.bf16.mxu0 %v862
        %948 = vmatpush1.bf16.msra.mxu0 %v861
        %949 = vmatprep.subr.bf16.mxu0 0
        %950 = vmatpush1.bf16.msra.mxu0 0
        %951 = vmatprep.subr.bf16.mxu0 0
        %952 = vmatpush1.bf16.msra.mxu0 0
        %953 = vmatprep.subr.bf16.mxu0 0
        %954 = vmatpush1.bf16.msra.mxu0 0
        %955 = vmatprep.subr.bf16.mxu0 0
        %956 = vmatpush1.bf16.msra.mxu0 0
        %957 = vmatprep.subr.bf16.mxu0 0
        %958 = vmatpush1.bf16.msra.mxu0 0
        %959 = vmatprep.subr.bf16.mxu0 0
        %960 = vmatpush1.bf16.msra.mxu0 0
        %961 = vmatprep.subr.bf16.mxu0 0
        %962 = vmatpush1.bf16.msra.mxu0 0
        %963 = vmatprep.subr.bf16.mxu0 0
        %964 = vmatpush1.bf16.msra.mxu0 0
        %965 = vmatprep.mubr.bf16.mxu0 0
        %966 = vmatmul.mubr.bf16.gmra.mrb[0].mxu0 %v506
        %v967 = vpop.f32.mrb[0].mxu0
        %v968 = vadd.f32 %v576, %v967
        %v969 = vpop.f32.mrb[0].mxu0
        %v970 = vadd.f32 %v580, %v969
        %v971 = vpop.f32.mrb[0].mxu0
        %v972 = vadd.f32 %v576, %v971
        %v973 = vpop.f32.mrb[0].mxu0
        %v974 = vadd.f32 %v580, %v973
        %975 = vdwg.mxu0
        %976 = vmatprep.subr.bf16.mxu0 %v808
        %977 = vmatpush1.bf16.msra.mxu0 %v807
        %978 = vmatprep.subr.bf16.mxu0 %v816
        %979 = vmatpush1.bf16.msra.mxu0 %v815
        %980 = vmatprep.subr.bf16.mxu0 %v824
        %981 = vmatpush1.bf16.msra.mxu0 %v823
        %982 = vmatprep.subr.bf16.mxu0 %v832
        %983 = vmatpush1.bf16.msra.mxu0 %v831
        %984 = vmatprep.subr.bf16.mxu0 %v840
        %985 = vmatpush1.bf16.msra.mxu0 %v839
        %986 = vmatprep.subr.bf16.mxu0 %v848
        %987 = vmatpush1.bf16.msra.mxu0 %v847
        %988 = vmatprep.subr.bf16.mxu0 %v856
        %989 = vmatpush1.bf16.msra.mxu0 %v855
        %990 = vmatprep.subr.bf16.mxu0 %v864
        %991 = vmatpush1.bf16.msra.mxu0 %v863
        %992 = vmatprep.subr.bf16.mxu0 0
        %993 = vmatpush1.bf16.msra.mxu0 0
        %994 = vmatprep.subr.bf16.mxu0 0
        %995 = vmatpush1.bf16.msra.mxu0 0
        %996 = vmatprep.subr.bf16.mxu0 0
        %997 = vmatpush1.bf16.msra.mxu0 0
        %998 = vmatprep.subr.bf16.mxu0 0
        %999 = vmatpush1.bf16.msra.mxu0 0
        %1000 = vmatprep.subr.bf16.mxu0 0
        %1001 = vmatpush1.bf16.msra.mxu0 0
        %1002 = vmatprep.subr.bf16.mxu0 0
        %1003 = vmatpush1.bf16.msra.mxu0 0
        %1004 = vmatprep.subr.bf16.mxu0 0
        %1005 = vmatpush1.bf16.msra.mxu0 0
        %1006 = vmatprep.subr.bf16.mxu0 0
        %1007 = vmatpush1.bf16.msra.mxu0 0
        %1008 = vmatprep.mubr.bf16.mxu0 0
        %1009 = vmatmul.mubr.bf16.gmra.mrb[0].mxu0 %v506
        %v1010 = vpop.f32.mrb[0].mxu0
        %v1011 = vadd.f32 %v584, %v1010
        %v1012 = vpop.f32.mrb[0].mxu0
        %v1013 = vadd.f32 %v588, %v1012
        %v1014 = vpop.f32.mrb[0].mxu0
        %v1015 = vadd.f32 %v584, %v1014
        %v1016 = vpop.f32.mrb[0].mxu0
        %v1017 = vadd.f32 %v588, %v1016
        %1018 = vdwg.mxu0
        %1019 = vmatprep.subr.bf16.mxu0 %v810
        %1020 = vmatpush1.bf16.msra.mxu0 %v809
        %1021 = vmatprep.subr.bf16.mxu0 %v818
        %1022 = vmatpush1.bf16.msra.mxu0 %v817
        %1023 = vmatprep.subr.bf16.mxu0 %v826
        %1024 = vmatpush1.bf16.msra.mxu0 %v825
        %1025 = vmatprep.subr.bf16.mxu0 %v834
        %1026 = vmatpush1.bf16.msra.mxu0 %v833
        %1027 = vmatprep.subr.bf16.mxu0 %v842
        %1028 = vmatpush1.bf16.msra.mxu0 %v841
        %1029 = vmatprep.subr.bf16.mxu0 %v850
        %1030 = vmatpush1.bf16.msra.mxu0 %v849
        %1031 = vmatprep.subr.bf16.mxu0 %v858
        %1032 = vmatpush1.bf16.msra.mxu0 %v857
        %1033 = vmatprep.subr.bf16.mxu0 %v866
        %1034 = vmatpush1.bf16.msra.mxu0 %v865
        %1035 = vmatprep.subr.bf16.mxu0 0
        %1036 = vmatpush1.bf16.msra.mxu0 0
        %1037 = vmatprep.subr.bf16.mxu0 0
        %1038 = vmatpush1.bf16.msra.mxu0 0
        %1039 = vmatprep.subr.bf16.mxu0 0
        %1040 = vmatpush1.bf16.msra.mxu0 0
        %1041 = vmatprep.subr.bf16.mxu0 0
        %1042 = vmatpush1.bf16.msra.mxu0 0
        %1043 = vmatprep.subr.bf16.mxu0 0
        %1044 = vmatpush1.bf16.msra.mxu0 0
        %1045 = vmatprep.subr.bf16.mxu0 0
        %1046 = vmatpush1.bf16.msra.mxu0 0
        %1047 = vmatprep.subr.bf16.mxu0 0
        %1048 = vmatpush1.bf16.msra.mxu0 0
        %1049 = vmatprep.subr.bf16.mxu0 0
        %1050 = vmatpush1.bf16.msra.mxu0 0
        %1051 = vmatprep.mubr.bf16.mxu0 0
        %1052 = vmatmul.mubr.bf16.gmra.mrb[0].mxu0 %v506
        %v1053 = vpop.f32.mrb[0].mxu0
        %v1054 = vadd.f32 %v592, %v1053
        %v1055 = vpop.f32.mrb[0].mxu0
        %v1056 = vadd.f32 %v596, %v1055
        %v1057 = vpop.f32.mrb[0].mxu0
        %v1058 = vadd.f32 %v592, %v1057
        %v1059 = vpop.f32.mrb[0].mxu0
        %v1060 = vadd.f32 %v596, %v1059
        %1061 = vdwg.mxu0
        %1062 = vmatprep.subr.bf16.mxu0 %v812
        %1063 = vmatpush1.bf16.msra.mxu0 %v811
        %1064 = vmatprep.subr.bf16.mxu0 %v820
        %1065 = vmatpush1.bf16.msra.mxu0 %v819
        %1066 = vmatprep.subr.bf16.mxu0 %v828
        %1067 = vmatpush1.bf16.msra.mxu0 %v827
        %1068 = vmatprep.subr.bf16.mxu0 %v836
        %1069 = vmatpush1.bf16.msra.mxu0 %v835
        %1070 = vmatprep.subr.bf16.mxu0 %v844
        %1071 = vmatpush1.bf16.msra.mxu0 %v843
        %1072 = vmatprep.subr.bf16.mxu0 %v852
        %1073 = vmatpush1.bf16.msra.mxu0 %v851
        %1074 = vmatprep.subr.bf16.mxu0 %v860
        %1075 = vmatpush1.bf16.msra.mxu0 %v859
        %1076 = vmatprep.subr.bf16.mxu0 %v868
        %1077 = vmatpush1.bf16.msra.mxu0 %v867
        %1078 = vmatprep.subr.bf16.mxu0 0
        %1079 = vmatpush1.bf16.msra.mxu0 0
        %1080 = vmatprep.subr.bf16.mxu0 0
        %1081 = vmatpush1.bf16.msra.mxu0 0
        %1082 = vmatprep.subr.bf16.mxu0 0
        %1083 = vmatpush1.bf16.msra.mxu0 0
        %1084 = vmatprep.subr.bf16.mxu0 0
        %1085 = vmatpush1.bf16.msra.mxu0 0
        %1086 = vmatprep.subr.bf16.mxu0 0
        %1087 = vmatpush1.bf16.msra.mxu0 0
        %1088 = vmatprep.subr.bf16.mxu0 0
        %1089 = vmatpush1.bf16.msra.mxu0 0
        %1090 = vmatprep.subr.bf16.mxu0 0
        %1091 = vmatpush1.bf16.msra.mxu0 0
        %1092 = vmatprep.subr.bf16.mxu0 0
        %1093 = vmatpush1.bf16.msra.mxu0 0
        %1094 = vmatprep.mubr.bf16.mxu0 0
        %1095 = vmatmul.mubr.bf16.gmra.mrb[0].mxu0 %v506
        %v1096 = vpop.f32.mrb[0].mxu0
        %v1097 = vadd.f32 %v600, %v1096
        %v1098 = vpop.f32.mrb[0].mxu0
        %v1099 = vadd.f32 %v604, %v1098
        %v1100 = vpop.f32.mrb[0].mxu0
        %v1101 = vadd.f32 %v600, %v1100
        %v1102 = vpop.f32.mrb[0].mxu0
        %v1103 = vadd.f32 %v604, %v1102
        %1104 = vdwg.mxu0
        %v1105 = vmax.f32 %v968, 0.0
        %v1106 = vmax.f32 %v970, 0.0
        %v1107 = vmax.f32 %v1011, 0.0
        %v1108 = vmax.f32 %v1013, 0.0
        %v1109 = vmax.f32 %v1054, 0.0
        %v1110 = vmax.f32 %v1056, 0.0
        %v1111 = vmax.f32 %v1097, 0.0
        %v1112 = vmax.f32 %v1099, 0.0
        %v1113 = vmax.f32 %v972, 0.0
        %v1114 = vmax.f32 %v974, 0.0
        %v1115 = vmax.f32 %v1015, 0.0
        %v1116 = vmax.f32 %v1017, 0.0
        %v1117 = vmax.f32 %v1058, 0.0
        %v1118 = vmax.f32 %v1060, 0.0
        %v1119 = vmax.f32 %v1101, 0.0
        %v1120 = vmax.f32 %v1103, 0.0
        %v1121 = vmax.f32 %v1105, %v1113
        %v1122 = vrot.slane %v1121, 4
        %v1123 = vmax.f32 %v1121, %v1122
        %v1124 = vrot.slane %v1123, 2
        %v1125 = vmax.f32 %v1123, %v1124
        %v1126 = vrot.slane %v1125, 1
        %v1127 = vmax.f32 %v1125, %v1126
        %v1128 = vmax.f32 %v1106, %v1114
        %v1129 = vrot.slane %v1128, 4
        %v1130 = vmax.f32 %v1128, %v1129
        %v1131 = vrot.slane %v1130, 2
        %v1132 = vmax.f32 %v1130, %v1131
        %v1133 = vrot.slane %v1132, 1
        %v1134 = vmax.f32 %v1132, %v1133
        %v1135 = vmax.f32 %v1107, %v1115
        %v1136 = vrot.slane %v1135, 4
        %v1137 = vmax.f32 %v1135, %v1136
        %v1138 = vrot.slane %v1137, 2
        %v1139 = vmax.f32 %v1137, %v1138
        %v1140 = vrot.slane %v1139, 1
        %v1141 = vmax.f32 %v1139, %v1140
        %v1142 = vmax.f32 %v1108, %v1116
        %v1143 = vrot.slane %v1142, 4
        %v1144 = vmax.f32 %v1142, %v1143
        %v1145 = vrot.slane %v1144, 2
        %v1146 = vmax.f32 %v1144, %v1145
        %v1147 = vrot.slane %v1146, 1
        %v1148 = vmax.f32 %v1146, %v1147
        %v1149 = vmax.f32 %v1109, %v1117
        %v1150 = vrot.slane %v1149, 4
        %v1151 = vmax.f32 %v1149, %v1150
        %v1152 = vrot.slane %v1151, 2
        %v1153 = vmax.f32 %v1151, %v1152
        %v1154 = vrot.slane %v1153, 1
        %v1155 = vmax.f32 %v1153, %v1154
        %v1156 = vmax.f32 %v1110, %v1118
        %v1157 = vrot.slane %v1156, 4
        %v1158 = vmax.f32 %v1156, %v1157
        %v1159 = vrot.slane %v1158, 2
        %v1160 = vmax.f32 %v1158, %v1159
        %v1161 = vrot.slane %v1160, 1
        %v1162 = vmax.f32 %v1160, %v1161
        %v1163 = vmax.f32 %v1111, %v1119
        %v1164 = vrot.slane %v1163, 4
        %v1165 = vmax.f32 %v1163, %v1164
        %v1166 = vrot.slane %v1165, 2
        %v1167 = vmax.f32 %v1165, %v1166
        %v1168 = vrot.slane %v1167, 1
        %v1169 = vmax.f32 %v1167, %v1168
        %v1170 = vmax.f32 %v1112, %v1120
        %v1171 = vrot.slane %v1170, 4
        %v1172 = vmax.f32 %v1170, %v1171
        %v1173 = vrot.slane %v1172, 2
        %v1174 = vmax.f32 %v1172, %v1173
        %v1175 = vrot.slane %v1174, 1
        %v1176 = vmax.f32 %v1174, %v1175
        %p1177 = scmp.eq.s32.totalorder %s27, 0
        // Predicated region
        $region53: #{tpu_custom_call.1} parent=47 // pred_check
          %p1178 = pneg %p1177
        $region54: #{tpu_custom_call.1} parent=47 // pred_check_branch
          %1180 = sbr.rel (%p1178) target = $region56
        $region55: #{tpu_custom_call.1} parent=47 // pred_region
          %1181 = vst [vmem:[%s309] sm:$0xff] 0.0
        $region56: #{tpu_custom_call.1} parent=47 // pred_fallthru
          _
        %v1182 = vld [vmem:[%s309] sm:$0xff]
        %v1191 = vcombine.low %v1127, %v1134
        %v1192 = vcombine.low %v1141, %v1148
        %v1193 = vcombine.low %v1155, %v1162
        %v1194 = vcombine.low %v1169, %v1176
        %v1196 = vunpack.c.l.s4 1966171168
        %v1197 = vunpack.c.0.s8 %v1196
        %v1198 = vlaneseq
        %v1199 = vshrl.u32 %v1198, 7
        %v1200 = vsub.s32 %v1197, %v1199
        %v1201 = vrot.slane %v1191, %v1200
        %v1203 = vunpack.c.l.s4 1966171168
        %v1204 = vunpack.c.0.s8 %v1203
        %v1205 = vlaneseq
        %v1206 = vshrl.u32 %v1205, 7
        %v1207 = vsub.s32 %v1204, %v1206
        %v1208 = vrot.slane %v1192, %v1207
        %v1210 = vunpack.c.l.s4 1966171168
        %v1211 = vunpack.c.0.s8 %v1210
        %v1212 = vlaneseq
        %v1213 = vshrl.u32 %v1212, 7
        %v1214 = vsub.s32 %v1211, %v1213
        %v1215 = vrot.slane %v1193, %v1214
        %v1217 = vunpack.c.l.s4 1966171168
        %v1218 = vunpack.c.0.s8 %v1217
        %v1219 = vlaneseq
        %v1220 = vshrl.u32 %v1219, 7
        %v1221 = vsub.s32 %v1218, %v1220
        %v1222 = vrot.slane %v1194, %v1221
        %v1223 = vcombine.low %v1201, %v1208
        %v1224 = vcombine.low %v1215, %v1222
        %v1226 = vunpack.c.l.s4 1966171168
        %v1227 = vunpack.c.0.s8 %v1226
        %v1228 = vlaneseq
        %v1229 = vshrl.u32 %v1228, 7
        %v1230 = vsub.s32 %v1227, %v1229
        %v1231 = vrot.slane %v1223, %v1230
        %v1233 = vunpack.c.l.s4 1966171168
        %v1234 = vunpack.c.0.s8 %v1233
        %v1235 = vlaneseq
        %v1236 = vshrl.u32 %v1235, 7
        %v1237 = vsub.s32 %v1234, %v1236
        %v1238 = vrot.slane %v1224, %v1237
        %v1239 = vcombine.low %v1231, %v1238
        %v1241 = vmax.f32 %v1182, %v1239
        %1242 = vst [vmem:[%s309] sm:$0xff] %v1241
        %s1243 = sand.u32 %s196, 1
        %s1244 = scalar_lea.sflag [#allocation4], %s1243
        %s1245 = sand.u32 %s196, 1
        %s1246 = smul.addr %s1245, 8
        %s1247 = scalar_lea.vmem [#allocation5], %s1246
        // Predicated region
        $region57: #{tpu_custom_call.1} parent=47 // pred_check
          %p1248 = pneg %p206
        $region58: #{tpu_custom_call.1} parent=47 // pred_check_branch
          %1250 = sbr.rel (%p1248) target = $region60
        $region59: #{tpu_custom_call.1} parent=47 // pred_region
          %s1252 = ssub.s32 128, 128
          %1253 = vsyncadd %s1244, %s1252
          %s1254 = smul.addr %s26, 8
          %s1255 = smul.addr %s1254, 16
          %s1256 = scalar_lea.hbm %s7, %s1255
          %s1258 = sshll.u32 %s1247, 4
          %s1259 = int_to_ptr.vmem [resolvable:$true] %s1258
          %1261 = dma.vmem_to_hbm [thread:$0]  %s1259, 128, %s1256, %s1244
        $region60: #{tpu_custom_call.1} parent=47 // pred_fallthru
          _
      $region48: #{tpu_custom_call.1} parent=5 // pred_fallthru
        _
      %p1262 = scmp.le.s32.totalorder 2, %s17
      // Predicated region
      $region61: #{tpu_custom_call.1} parent=5 // pred_check
        %p1263 = pneg %p1262
      $region62: #{tpu_custom_call.1} parent=5 // pred_check_branch
        %1265 = sbr.rel (%p1263) target = $region64
      $region63: #{tpu_custom_call.1} parent=5 // pred_region
        %s1266 = ssub.s32 %s17, 2
        // Predicated region
        $region65: #{tpu_custom_call.1} parent=63 // pred_check
          %p1267 = pneg %p212
        $region66: #{tpu_custom_call.1} parent=63 // pred_check_branch
          %1269 = sbr.rel (%p1267) target = $region68
        $region67: #{tpu_custom_call.1} parent=63 // pred_region
          %s1270 = sand.u32 %s197, 1
          %s1271 = scalar_lea.sflag [#allocation4], %s1270
          %s1272 = sand.u32 %s197, 1
          %s1273 = smul.addr %s1272, 8
          %s1274 = scalar_lea.vmem [#allocation5], %s1273
          %1275 = dma.done %s1271, 128
        $region68: #{tpu_custom_call.1} parent=63 // pred_fallthru
          _
      $region64: #{tpu_custom_call.1} parent=5 // pred_fallthru
        _
    $region6: #{tpu_custom_call.1} parent=1 // loop_footer
      %s21 = sadd.s32 1, %s17
    $region7: #{tpu_custom_call.1} parent=1 // loop_footer_branch
      %16 = sbr.rel target = $region3
    $region8: #{tpu_custom_call.1} parent=1 // loop_exit
      _
    %1276 = vsyncpa [#allocation3], 1
    %s1277 = scalar_lea.sflag [#allocation3], 1
    %1278 = vsyncpa %s1277, 1
    %1279 = vsyncpa [#allocation4], 1
    %s1280 = scalar_lea.sflag [#allocation4], 1
    %1281 = vsyncpa %s1280, 1

</llo_original>
